<compile_context>
chip_gen: v7x
topology: tpu7x:2x2x1
jax: 0.10.0
libtpu: 0.0.40
codegen_flags: <defaults>
</compile_context>

<pallas_src>
import functools

import jax
import jax.numpy as jnp
from jax.experimental import pallas as pl
from jax.experimental.pallas import tpu as pltpu


def _soft_argmax_kernel(hm_ref, lmat_ref, rmat_ref, beta_ref, col_ref, row_ref,
                        out_ref, *, C, H, W):
    # hm_ref:   (1, C*H, W)   heatmaps of one batch element, channel-flattened
    # lmat_ref: (C*H, C*H)    block-diagonal vertical 7-tap 0/1 band matrix
    # rmat_ref: (W, W)        horizontal 7-tap 0/1 band matrix
    # beta_ref: (C, 1, 1)     per-keypoint temperature
    # col_ref:  (1, 1, W)     column coordinates * size_mult
    # row_ref:  (1, H, 1)     row coordinates * size_mult
    # out_ref:  (1, C, 1, 2)  expected (x, y) per keypoint
    x = hm_ref[0].astype(jnp.float32)                                   # (C*H, W)

    # --- 7x7 avg pool (stride 1, zero pad 3, divisor 49) as two MXU matmuls ---
    v = jnp.dot(lmat_ref[...], x, preferred_element_type=jnp.float32)   # (C*H, W)
    p = jnp.dot(v, rmat_ref[...], preferred_element_type=jnp.float32)   # (C*H, W)
    pooled = (p * (1.0 / 49.0)).reshape(C, H, W)                         # per-channel

    # --- per-channel softmax with temperature beta (max-stabilized) ---
    m = jnp.max(jnp.max(pooled, axis=2, keepdims=True), axis=1, keepdims=True)  # (C,1,1)
    m_b = jnp.broadcast_to(m, (C, H, 1))
    beta_b = jnp.broadcast_to(beta_ref[...], (C, H, 1))
    e = jnp.exp(beta_b * (pooled - m_b))                                 # (C, H, W)

    # --- factored expectation sums (no full (H,W) normalization divide) ---
    sum_h = jnp.sum(e, axis=1, keepdims=True)                            # (C, 1, W)
    sum_w = jnp.sum(e, axis=2, keepdims=True)                            # (C, H, 1)
    s = jnp.sum(sum_h, axis=2, keepdims=True)                            # (C, 1, 1)
    sx = jnp.sum(sum_h * col_ref[...], axis=2, keepdims=True)            # (C, 1, 1)
    sy = jnp.sum(sum_w * row_ref[...], axis=1, keepdims=True)            # (C, 1, 1)

    inv = 1.0 / (s + 1e-8)                                               # (C, 1, 1)
    out_ref[0] = jnp.concatenate([sx * inv, sy * inv], axis=2)           # (C, 1, 2)


def soft_argmax_pavlo(heatmaps, beta, size_mult=1.0):
    """heatmaps: (B, C, H, W); beta: (C,) -> (B, C, 2) f32 with [...,0]=x, [...,1]=y."""
    B, C, H, W = heatmaps.shape
    hm = heatmaps.astype(jnp.float32).reshape(B, C * H, W)   # contiguous reshape, free

    # Banded 0/1 averaging matrices.  L is block-diagonal over channels so one
    # (C*H, C*H) @ (C*H, W) matmul vertically pools every channel at once; R pools
    # horizontally.  Out-of-range taps hit zero rows/cols => zero padding, and the
    # fixed /49 matches count_include_pad=True.
    idx = jnp.arange(C * H, dtype=jnp.int32)
    ch, r = idx // H, idx % H
    lmat = ((ch[:, None] == ch[None, :]) &
            (jnp.abs(r[:, None] - r[None, :]) <= 3)).astype(jnp.float32)
    wi = jnp.arange(W, dtype=jnp.int32)
    rmat = (jnp.abs(wi[:, None] - wi[None, :]) <= 3).astype(jnp.float32)

    col = (jnp.arange(W, dtype=jnp.float32) * size_mult).reshape(1, 1, W)
    row = (jnp.arange(H, dtype=jnp.float32) * size_mult).reshape(1, H, 1)
    beta3 = beta.astype(jnp.float32).reshape(C, 1, 1)

    kernel = functools.partial(_soft_argmax_kernel, C=C, H=H, W=W)

    grid_spec = pltpu.PrefetchScalarGridSpec(
        num_scalar_prefetch=0,
        grid=(B,),                                            # >= 2 parallel steps for v7x
        in_specs=[
            pl.BlockSpec((1, C * H, W), lambda b: (b, 0, 0)),
            pl.BlockSpec((C * H, C * H), lambda b: (0, 0)),
            pl.BlockSpec((W, W), lambda b: (0, 0)),
            pl.BlockSpec((C, 1, 1), lambda b: (0, 0, 0)),
            pl.BlockSpec((1, 1, W), lambda b: (0, 0, 0)),
            pl.BlockSpec((1, H, 1), lambda b: (0, 0, 0)),
        ],
        out_specs=pl.BlockSpec((1, C, 1, 2), lambda b: (b, 0, 0, 0)),
    )

    out = pl.pallas_call(
        kernel,
        grid_spec=grid_spec,
        out_shape=jax.ShapeDtypeStruct((B, C, 1, 2), jnp.float32),
        compiler_params=pltpu.CompilerParams(
            dimension_semantics=("parallel",)),
    )(hm, lmat, rmat, beta3, col, row)

    return out.reshape(B, C, 2)


def _reference(heatmaps, beta, size_mult=1.0):
    """Pure-JAX reference mirroring the PyTorch forward pass (exact f32 pooling)."""
    B, C, H, W = heatmaps.shape
    pooled = jax.lax.reduce_window(
        heatmaps.astype(jnp.float32), 0.0, jax.lax.add,
        (1, 1, 7, 7), (1, 1, 1, 1),
        [(0, 0), (0, 0), (3, 3), (3, 3)]) / 49.0
    flat = pooled.reshape(B, C, -1)
    m = jnp.max(flat, axis=2, keepdims=True)
    e = jnp.exp(beta.reshape(1, C, 1) * (flat - m))
    s = jnp.sum(e, axis=2, keepdims=True)
    norm = (e / (s + 1e-8)).reshape(B, C, H, W)
    col = jnp.arange(W, dtype=jnp.float32) * size_mult
    row = jnp.arange(H, dtype=jnp.float32) * size_mult
    xv = jnp.sum(norm * col[None, None, None, :], axis=(2, 3))
    yv = jnp.sum(norm * row[None, None, :, None], axis=(2, 3))
    return jnp.stack([xv, yv], axis=2)


if __name__ == "__main__":
    key = jax.random.PRNGKey(0)
    B, C, H, W = 2, 4, 16, 16          # n_keypoints == C
    heatmaps = jax.random.normal(key, (B, C, H, W), dtype=jnp.float32)

    initial_beta = 25.0                # learned_beta=False => fixed beta
    beta = jnp.ones((C,), dtype=jnp.float32) * initial_beta

    out = soft_argmax_pavlo(heatmaps, beta, size_mult=1.0)
    out = jax.block_until_ready(out)

    ref = _reference(heatmaps, beta, size_mult=1.0)
    assert out.shape == (B, C, 2), out.shape
    # Coordinates live in [0, W); 1e-2 pixel tolerance is well below any real bug and
    # covers potential reduced-precision MXU passes in the pooling matmuls.
    assert jnp.allclose(out, ref, atol=1e-2, rtol=1e-2), (out, ref)

    print("KERNEL_OK")
</pallas_src>

<mosaic_0001>
module attributes {stable_mosaic.version = 11 : i64} {
  func.func @_soft_argmax_kernel(%arg0: i32, %arg1: memref<1x64x16xf32, #tpu.memory_space<vmem>>, %arg2: memref<64x64xf32, #tpu.memory_space<vmem>>, %arg3: memref<16x16xf32, #tpu.memory_space<vmem>>, %arg4: memref<4x1x1xf32, #tpu.memory_space<vmem>>, %arg5: memref<1x1x16xf32, #tpu.memory_space<vmem>>, %arg6: memref<1x16x1xf32, #tpu.memory_space<vmem>>, %arg7: memref<1x4x1x2xf32, #tpu.memory_space<vmem>>) attributes {dimension_semantics = [#tpu.dimension_semantics<parallel>], iteration_bounds = array<i64: 2>, scalar_prefetch = 0 : i64, scratch_operands = 0 : i64, tpu.core_type = #tpu.core_type<tc>, window_params = [{transform_indices = @transform_0, window_bounds = array<i64: 1, 64, 16>}, {pipeline_mode = #tpu.pipeline_mode<synchronous>, transform_indices = @transform_1, window_bounds = array<i64: 64, 64>}, {pipeline_mode = #tpu.pipeline_mode<synchronous>, transform_indices = @transform_2, window_bounds = array<i64: 16, 16>}, {pipeline_mode = #tpu.pipeline_mode<synchronous>, transform_indices = @transform_3, window_bounds = array<i64: 4, 1, 1>}, {pipeline_mode = #tpu.pipeline_mode<synchronous>, transform_indices = @transform_4, window_bounds = array<i64: 1, 1, 16>}, {pipeline_mode = #tpu.pipeline_mode<synchronous>, transform_indices = @transform_5, window_bounds = array<i64: 1, 16, 1>}, {transform_indices = @transform_6, window_bounds = array<i64: 1, 4, 1, 2>}]} {
    %c0 = arith.constant 0 : index
    %c0_0 = arith.constant 0 : index
    %c0_1 = arith.constant 0 : index
    %0 = vector.load %arg1[%c0, %c0_0, %c0_1] : memref<1x64x16xf32, #tpu.memory_space<vmem>>, vector<1x64x16xf32>
    %1 = vector.shape_cast %0 : vector<1x64x16xf32> to vector<64x16xf32>
    %c0_2 = arith.constant 0 : index
    %c0_3 = arith.constant 0 : index
    %2 = vector.load %arg2[%c0_2, %c0_3] : memref<64x64xf32, #tpu.memory_space<vmem>>, vector<64x64xf32>
    %cst = arith.constant dense<0.000000e+00> : vector<64x16xf32>
    %3 = tpu.matmul %2, %1, %cst {dimension_numbers = #tpu.dot_dimension_numbers<[1], [0], [0], [1], [0, 0, 1, 1], [], []>} : vector<64x64xf32>, vector<64x16xf32>, vector<64x16xf32> -> vector<64x16xf32>
    %c0_4 = arith.constant 0 : index
    %c0_5 = arith.constant 0 : index
    %4 = vector.load %arg3[%c0_4, %c0_5] : memref<16x16xf32, #tpu.memory_space<vmem>>, vector<16x16xf32>
    %cst_6 = arith.constant dense<0.000000e+00> : vector<64x16xf32>
    %5 = tpu.matmul %3, %4, %cst_6 {dimension_numbers = #tpu.dot_dimension_numbers<[1], [0], [0], [1], [0, 0, 1, 1], [], []>} : vector<64x16xf32>, vector<16x16xf32>, vector<64x16xf32> -> vector<64x16xf32>
    %cst_7 = arith.constant 0.0204081628 : f32
    %6 = vector.broadcast %cst_7 : f32 to vector<64x16xf32>
    %7 = arith.mulf %5, %6 : vector<64x16xf32>
    %8 = vector.shape_cast %7 : vector<64x16xf32> to vector<4x16x16xf32>
    %cst_8 = arith.constant dense<0xFF800000> : vector<4x16xf32>
    %9 = vector.multi_reduction <maximumf>, %8, %cst_8 [2] : vector<4x16x16xf32> to vector<4x16xf32>
    %10 = vector.shape_cast %9 : vector<4x16xf32> to vector<4x16x1xf32>
    %cst_9 = arith.constant dense<0xFF800000> : vector<4x1xf32>
    %11 = vector.multi_reduction <maximumf>, %10, %cst_9 [1] : vector<4x16x1xf32> to vector<4x1xf32>
    %12 = vector.shape_cast %11 : vector<4x1xf32> to vector<4x1x1xf32>
    %13 = vector.shape_cast %12 : vector<4x1x1xf32> to vector<4x1x1xf32>
    %14 = vector.broadcast %13 : vector<4x1x1xf32> to vector<4x16x1xf32>
    %c0_10 = arith.constant 0 : index
    %c0_11 = arith.constant 0 : index
    %c0_12 = arith.constant 0 : index
    %15 = vector.load %arg4[%c0_10, %c0_11, %c0_12] : memref<4x1x1xf32, #tpu.memory_space<vmem>>, vector<4x1x1xf32>
    %16 = vector.shape_cast %15 : vector<4x1x1xf32> to vector<4x1x1xf32>
    %17 = vector.broadcast %16 : vector<4x1x1xf32> to vector<4x16x1xf32>
    %18 = vector.broadcast %14 : vector<4x16x1xf32> to vector<4x16x16xf32>
    %19 = arith.subf %8, %18 : vector<4x16x16xf32>
    %20 = vector.broadcast %17 : vector<4x16x1xf32> to vector<4x16x16xf32>
    %21 = arith.mulf %20, %19 : vector<4x16x16xf32>
    %22 = math.exp %21 : vector<4x16x16xf32>
    %cst_13 = arith.constant dense<0.000000e+00> : vector<4x16xf32>
    %23 = vector.multi_reduction <add>, %22, %cst_13 [1] : vector<4x16x16xf32> to vector<4x16xf32>
    %24 = vector.shape_cast %23 : vector<4x16xf32> to vector<4x1x16xf32>
    %cst_14 = arith.constant dense<0.000000e+00> : vector<4x16xf32>
    %25 = vector.multi_reduction <add>, %22, %cst_14 [2] : vector<4x16x16xf32> to vector<4x16xf32>
    %26 = vector.shape_cast %25 : vector<4x16xf32> to vector<4x16x1xf32>
    %cst_15 = arith.constant dense<0.000000e+00> : vector<4x1xf32>
    %27 = vector.multi_reduction <add>, %24, %cst_15 [2] : vector<4x1x16xf32> to vector<4x1xf32>
    %28 = vector.shape_cast %27 : vector<4x1xf32> to vector<4x1x1xf32>
    %c0_16 = arith.constant 0 : index
    %c0_17 = arith.constant 0 : index
    %c0_18 = arith.constant 0 : index
    %29 = vector.load %arg5[%c0_16, %c0_17, %c0_18] : memref<1x1x16xf32, #tpu.memory_space<vmem>>, vector<1x1x16xf32>
    %30 = vector.broadcast %29 : vector<1x1x16xf32> to vector<4x1x16xf32>
    %31 = arith.mulf %24, %30 : vector<4x1x16xf32>
    %cst_19 = arith.constant dense<0.000000e+00> : vector<4x1xf32>
    %32 = vector.multi_reduction <add>, %31, %cst_19 [2] : vector<4x1x16xf32> to vector<4x1xf32>
    %33 = vector.shape_cast %32 : vector<4x1xf32> to vector<4x1x1xf32>
    %c0_20 = arith.constant 0 : index
    %c0_21 = arith.constant 0 : index
    %c0_22 = arith.constant 0 : index
    %34 = vector.load %arg6[%c0_20, %c0_21, %c0_22] : memref<1x16x1xf32, #tpu.memory_space<vmem>>, vector<1x16x1xf32>
    %35 = vector.broadcast %34 : vector<1x16x1xf32> to vector<4x16x1xf32>
    %36 = arith.mulf %26, %35 : vector<4x16x1xf32>
    %cst_23 = arith.constant dense<0.000000e+00> : vector<4x1xf32>
    %37 = vector.multi_reduction <add>, %36, %cst_23 [1] : vector<4x16x1xf32> to vector<4x1xf32>
    %38 = vector.shape_cast %37 : vector<4x1xf32> to vector<4x1x1xf32>
    %cst_24 = arith.constant 9.99999993E-9 : f32
    %39 = vector.broadcast %cst_24 : f32 to vector<4x1x1xf32>
    %40 = arith.addf %28, %39 : vector<4x1x1xf32>
    %cst_25 = arith.constant 1.000000e+00 : f32
    %41 = vector.broadcast %cst_25 : f32 to vector<4x1x1xf32>
    %42 = arith.divf %41, %40 : vector<4x1x1xf32>
    %43 = arith.mulf %33, %42 : vector<4x1x1xf32>
    %44 = arith.mulf %38, %42 : vector<4x1x1xf32>
    %45 = tpu.concatenate %43, %44 in 2 : vector<4x1x1xf32>, vector<4x1x1xf32> -> vector<4x1x2xf32>
    %c0_26 = arith.constant 0 : index
    %c0_27 = arith.constant 0 : index
    %c0_28 = arith.constant 0 : index
    %c0_29 = arith.constant 0 : index
    %46 = vector.load %arg7[%c0_26, %c0_27, %c0_28, %c0_29] : memref<1x4x1x2xf32, #tpu.memory_space<vmem>>, vector<1x4x1x2xf32>
    %47 = vector.shape_cast %46 : vector<1x4x1x2xf32> to vector<4x1x2xf32>
    %48 = vector.shape_cast %45 : vector<4x1x2xf32> to vector<1x4x1x2xf32>
    tpu.vector_store %arg7[%c0_26, %c0_27, %c0_28, %c0_29], %48 {strides = array<i32>} : memref<1x4x1x2xf32, #tpu.memory_space<vmem>>, vector<1x4x1x2xf32>,
    return
  }
  func.func @transform_0(%arg0: i32) -> (i32, i32, i32) {
    %c0_i32 = arith.constant 0 : i32
    %c0_i32_0 = arith.constant 0 : i32
    %c0_i32_1 = arith.constant 0 : i32
    return %arg0, %c0_i32, %c0_i32_0 : i32, i32, i32
  }
  func.func @transform_1(%arg0: i32) -> (i32, i32) {
    %c0_i32 = arith.constant 0 : i32
    %c0_i32_0 = arith.constant 0 : i32
    %c0_i32_1 = arith.constant 0 : i32
    return %c0_i32, %c0_i32_0 : i32, i32
  }
  func.func @transform_2(%arg0: i32) -> (i32, i32) {
    %c0_i32 = arith.constant 0 : i32
    %c0_i32_0 = arith.constant 0 : i32
    %c0_i32_1 = arith.constant 0 : i32
    return %c0_i32, %c0_i32_0 : i32, i32
  }
  func.func @transform_3(%arg0: i32) -> (i32, i32, i32) {
    %c0_i32 = arith.constant 0 : i32
    %c0_i32_0 = arith.constant 0 : i32
    %c0_i32_1 = arith.constant 0 : i32
    %c0_i32_2 = arith.constant 0 : i32
    return %c0_i32, %c0_i32_0, %c0_i32_1 : i32, i32, i32
  }
  func.func @transform_4(%arg0: i32) -> (i32, i32, i32) {
    %c0_i32 = arith.constant 0 : i32
    %c0_i32_0 = arith.constant 0 : i32
    %c0_i32_1 = arith.constant 0 : i32
    %c0_i32_2 = arith.constant 0 : i32
    return %c0_i32, %c0_i32_0, %c0_i32_1 : i32, i32, i32
  }
  func.func @transform_5(%arg0: i32) -> (i32, i32, i32) {
    %c0_i32 = arith.constant 0 : i32
    %c0_i32_0 = arith.constant 0 : i32
    %c0_i32_1 = arith.constant 0 : i32
    %c0_i32_2 = arith.constant 0 : i32
    return %c0_i32, %c0_i32_0, %c0_i32_1 : i32, i32, i32
  }
  func.func @transform_6(%arg0: i32) -> (i32, i32, i32, i32) {
    %c0_i32 = arith.constant 0 : i32
    %c0_i32_0 = arith.constant 0 : i32
    %c0_i32_1 = arith.constant 0 : i32
    %c0_i32_2 = arith.constant 0 : i32
    return %arg0, %c0_i32, %c0_i32_0, %c0_i32_1 : i32, i32, i32, i32
  }
}

</mosaic_0001>

<llo_original>
// kernel: tpu_custom_call.1
$region0: #{tpu_custom_call.1}
  #allocation0 [shape = 'u32[]', space=smem, size = 0x4, offset = 0x4, fixed_abs, tag = 'smem constant byte address 0x4 - core index']
  #allocation1 [shape = 'u32[144,128]{1,0:T(1,128)}', space=vmem, size = 0x12000, scoped, tag = 'internal scratch']
  %s0 = inlined_call_operand.vmem [shape: f32[2,64,16], index: 0, kind: input, shape index: {}]
  %s1 = inlined_call_operand.vmem [shape: f32[64,64], index: 1, kind: input, shape index: {}]
  %s2 = inlined_call_operand.vmem [shape: f32[16,16], index: 2, kind: input, shape index: {}]
  %s3 = inlined_call_operand.vmem [shape: f32[4,1,1], index: 3, kind: input, shape index: {}]
  %s4 = inlined_call_operand.vmem [shape: f32[1,1,16], index: 4, kind: input, shape index: {}]
  %s5 = inlined_call_operand.vmem [shape: f32[1,16,1], index: 5, kind: input, shape index: {}]
  %s6 = inlined_call_operand.vmem [shape: f32[2,4,1,2], index: 6, kind: output, shape index: {}]
  %s7 = sld [smem:[#allocation0]]
  $region57: #{tpu_custom_call.1} parent=0
    _
  %s9 = ssub.s32 1, %s7
  %s10 = scalar_select 0, %s9, %s7
  loop: start=0, step=1, limit=4
  $region2: #{tpu_custom_call.1} parent=0 // loop_pre_header
    _
  $region3: #{tpu_custom_call.1} parent=0 // loop_header
    %s12 = sphi 0, %s16
    %p13 = scmp.ge.s32.totalorder %s12, 4
    %s22 = sphi 0, %s24
    %s25 = sphi 0, %s22
    %s26 = sphi 0, %s25
    %s42 = sphi 0, %s26
    %s46 = sphi 0, %s46
    %s48 = sphi 0, %s46
    %s49 = sphi 0, %s48
    %s63 = sphi 0, %s49
    %s67 = sphi 0, %s67
    %s69 = sphi 0, %s67
    %s70 = sphi 0, %s69
    %s84 = sphi 0, %s70
    %s88 = sphi 0, %s88
    %s90 = sphi 0, %s88
    %s91 = sphi 0, %s90
    %s105 = sphi 0, %s91
    %s109 = sphi 0, %s109
    %s111 = sphi 0, %s109
    %s112 = sphi 0, %s111
    %s126 = sphi 0, %s112
    %s130 = sphi 0, %s130
    %s132 = sphi 0, %s130
    %s133 = sphi 0, %s132
    %s147 = sphi 0, %s133
    %s153 = sphi 0, %s155
    %s156 = sphi 0, %s153
    %s157 = sphi 0, %s156
    %s173 = sphi 0, %s157
  $region4: #{tpu_custom_call.1} parent=0 // loop_header_branch
    %15 = sbr.rel (%p13) target = $region8
  $region5: #{tpu_custom_call.1} parent=0 // loop_body
    %s17 = ssub.s32 %s12, 1
    %s18 = ssub.s32 %s12, 2
    %s19 = sadd.s32 %s12, 1
    %s20 = ssub.s32 %s12, %s19
    %p21 = scmp.eq.s32.totalorder %s20, 0
    %s23 = sadd.s32 %s22, 1
    %s24 = scalar_select %p21, %s22, %s23
    %p27 = pneg %p21
    %p28 = scmp.eq.s32.totalorder %s12, 1
    %p29 = por %p27, %p28
    %p30 = scmp.ne.s32.totalorder %s22, %s25
    %p31 = scmp.eq.s32.totalorder %s12, 0
    %p32 = por %p30, %p31
    %p33 = scmp.ne.s32.totalorder %s22, %s25
    %p34 = scmp.eq.s32.totalorder %s17, 1
    %p35 = por %p33, %p34
    %p36 = scmp.ne.s32.totalorder %s25, %s26
    %p37 = scmp.eq.s32.totalorder %s17, 0
    %p38 = por %p36, %p37
    %p39 = scmp.ne.s32.totalorder %s25, %s26
    %p40 = scmp.eq.s32.totalorder %s18, 1
    %p41 = por %p39, %p40
    %p43 = scmp.ne.s32.totalorder %s26, %s42
    %p44 = scmp.eq.s32.totalorder %s18, 0
    %p45 = por %p43, %p44
    %s47 = sadd.s32 %s46, 1
    %p50 = scmp.eq.s32.totalorder %s12, 1
    %p51 = scmp.ne.s32.totalorder %s46, %s48
    %p52 = scmp.eq.s32.totalorder %s12, 0
    %p53 = por %p51, %p52
    %p54 = scmp.ne.s32.totalorder %s46, %s48
    %p55 = scmp.eq.s32.totalorder %s17, 1
    %p56 = por %p54, %p55
    %p57 = scmp.ne.s32.totalorder %s48, %s49
    %p58 = scmp.eq.s32.totalorder %s17, 0
    %p59 = por %p57, %p58
    %p60 = scmp.ne.s32.totalorder %s48, %s49
    %p61 = scmp.eq.s32.totalorder %s18, 1
    %p62 = por %p60, %p61
    %p64 = scmp.ne.s32.totalorder %s49, %s63
    %p65 = scmp.eq.s32.totalorder %s18, 0
    %p66 = por %p64, %p65
    %s68 = sadd.s32 %s67, 1
    %p71 = scmp.eq.s32.totalorder %s12, 1
    %p72 = scmp.ne.s32.totalorder %s67, %s69
    %p73 = scmp.eq.s32.totalorder %s12, 0
    %p74 = por %p72, %p73
    %p75 = scmp.ne.s32.totalorder %s67, %s69
    %p76 = scmp.eq.s32.totalorder %s17, 1
    %p77 = por %p75, %p76
    %p78 = scmp.ne.s32.totalorder %s69, %s70
    %p79 = scmp.eq.s32.totalorder %s17, 0
    %p80 = por %p78, %p79
    %p81 = scmp.ne.s32.totalorder %s69, %s70
    %p82 = scmp.eq.s32.totalorder %s18, 1
    %p83 = por %p81, %p82
    %p85 = scmp.ne.s32.totalorder %s70, %s84
    %p86 = scmp.eq.s32.totalorder %s18, 0
    %p87 = por %p85, %p86
    %s89 = sadd.s32 %s88, 1
    %p92 = scmp.eq.s32.totalorder %s12, 1
    %p93 = scmp.ne.s32.totalorder %s88, %s90
    %p94 = scmp.eq.s32.totalorder %s12, 0
    %p95 = por %p93, %p94
    %p96 = scmp.ne.s32.totalorder %s88, %s90
    %p97 = scmp.eq.s32.totalorder %s17, 1
    %p98 = por %p96, %p97
    %p99 = scmp.ne.s32.totalorder %s90, %s91
    %p100 = scmp.eq.s32.totalorder %s17, 0
    %p101 = por %p99, %p100
    %p102 = scmp.ne.s32.totalorder %s90, %s91
    %p103 = scmp.eq.s32.totalorder %s18, 1
    %p104 = por %p102, %p103
    %p106 = scmp.ne.s32.totalorder %s91, %s105
    %p107 = scmp.eq.s32.totalorder %s18, 0
    %p108 = por %p106, %p107
    %s110 = sadd.s32 %s109, 1
    %p113 = scmp.eq.s32.totalorder %s12, 1
    %p114 = scmp.ne.s32.totalorder %s109, %s111
    %p115 = scmp.eq.s32.totalorder %s12, 0
    %p116 = por %p114, %p115
    %p117 = scmp.ne.s32.totalorder %s109, %s111
    %p118 = scmp.eq.s32.totalorder %s17, 1
    %p119 = por %p117, %p118
    %p120 = scmp.ne.s32.totalorder %s111, %s112
    %p121 = scmp.eq.s32.totalorder %s17, 0
    %p122 = por %p120, %p121
    %p123 = scmp.ne.s32.totalorder %s111, %s112
    %p124 = scmp.eq.s32.totalorder %s18, 1
    %p125 = por %p123, %p124
    %p127 = scmp.ne.s32.totalorder %s112, %s126
    %p128 = scmp.eq.s32.totalorder %s18, 0
    %p129 = por %p127, %p128
    %s131 = sadd.s32 %s130, 1
    %p134 = scmp.eq.s32.totalorder %s12, 1
    %p135 = scmp.ne.s32.totalorder %s130, %s132
    %p136 = scmp.eq.s32.totalorder %s12, 0
    %p137 = por %p135, %p136
    %p138 = scmp.ne.s32.totalorder %s130, %s132
    %p139 = scmp.eq.s32.totalorder %s17, 1
    %p140 = por %p138, %p139
    %p141 = scmp.ne.s32.totalorder %s132, %s133
    %p142 = scmp.eq.s32.totalorder %s17, 0
    %p143 = por %p141, %p142
    %p144 = scmp.ne.s32.totalorder %s132, %s133
    %p145 = scmp.eq.s32.totalorder %s18, 1
    %p146 = por %p144, %p145
    %p148 = scmp.ne.s32.totalorder %s133, %s147
    %p149 = scmp.eq.s32.totalorder %s18, 0
    %p150 = por %p148, %p149
    %s151 = ssub.s32 %s12, %s19
    %p152 = scmp.eq.s32.totalorder %s151, 0
    %s154 = sadd.s32 %s153, 1
    %s155 = scalar_select %p152, %s153, %s154
    %p158 = pneg %p152
    %p159 = scmp.eq.s32.totalorder %s12, 1
    %p160 = por %p158, %p159
    %p161 = scmp.ne.s32.totalorder %s153, %s156
    %p162 = scmp.eq.s32.totalorder %s12, 0
    %p163 = por %p161, %p162
    %p164 = scmp.ne.s32.totalorder %s153, %s156
    %p165 = scmp.eq.s32.totalorder %s17, 1
    %p166 = por %p164, %p165
    %p167 = scmp.ne.s32.totalorder %s156, %s157
    %p168 = scmp.eq.s32.totalorder %s17, 0
    %p169 = por %p167, %p168
    %p170 = scmp.ne.s32.totalorder %s156, %s157
    %p171 = scmp.eq.s32.totalorder %s18, 1
    %p172 = por %p170, %p171
    %p174 = scmp.ne.s32.totalorder %s157, %s173
    %p175 = scmp.eq.s32.totalorder %s18, 0
    %p176 = por %p174, %p175
    %p177 = scmp.le.s32.totalorder 1, %s12
    %p178 = scmp.lt.s32.totalorder %s12, 3
    %p179 = pnand %p177, %p178
    %p180 = pneg %p179
    // Predicated region
    $region9: #{tpu_custom_call.1} parent=5 // pred_check
      _
    $region10: #{tpu_custom_call.1} parent=5 // pred_check_branch
      %182 = sbr.rel (%p179) target = $region12
    $region11: #{tpu_custom_call.1} parent=5 // pred_region
      %s183 = ssub.s32 %s12, 1
      // Predicated region
      $region13: #{tpu_custom_call.1} parent=11 // pred_check
        %p184 = pneg %p59
      $region14: #{tpu_custom_call.1} parent=11 // pred_check_branch
        %186 = sbr.rel (%p184) target = $region16
      $region15: #{tpu_custom_call.1} parent=11 // pred_region
        _
      $region16: #{tpu_custom_call.1} parent=11 // pred_fallthru
        _
      // Predicated region
      $region17: #{tpu_custom_call.1} parent=11 // pred_check
        %p187 = pneg %p80
      $region18: #{tpu_custom_call.1} parent=11 // pred_check_branch
        %189 = sbr.rel (%p187) target = $region20
      $region19: #{tpu_custom_call.1} parent=11 // pred_region
        _
      $region20: #{tpu_custom_call.1} parent=11 // pred_fallthru
        _
      // Predicated region
      $region21: #{tpu_custom_call.1} parent=11 // pred_check
        %p190 = pneg %p101
      $region22: #{tpu_custom_call.1} parent=11 // pred_check_branch
        %192 = sbr.rel (%p190) target = $region24
      $region23: #{tpu_custom_call.1} parent=11 // pred_region
        _
      $region24: #{tpu_custom_call.1} parent=11 // pred_fallthru
        _
      // Predicated region
      $region25: #{tpu_custom_call.1} parent=11 // pred_check
        %p193 = pneg %p122
      $region26: #{tpu_custom_call.1} parent=11 // pred_check_branch
        %195 = sbr.rel (%p193) target = $region28
      $region27: #{tpu_custom_call.1} parent=11 // pred_region
        _
      $region28: #{tpu_custom_call.1} parent=11 // pred_fallthru
        _
      // Predicated region
      $region29: #{tpu_custom_call.1} parent=11 // pred_check
        %p196 = pneg %p143
      $region30: #{tpu_custom_call.1} parent=11 // pred_check_branch
        %198 = sbr.rel (%p196) target = $region32
      $region31: #{tpu_custom_call.1} parent=11 // pred_region
        _
      $region32: #{tpu_custom_call.1} parent=11 // pred_fallthru
        _
    $region12: #{tpu_custom_call.1} parent=5 // pred_fallthru
      _
    %p199 = scmp.lt.s32.totalorder %s12, 2
    // Predicated region
    $region33: #{tpu_custom_call.1} parent=5 // pred_check
      %p200 = pneg %p199
    $region34: #{tpu_custom_call.1} parent=5 // pred_check_branch
      %202 = sbr.rel (%p200) target = $region36
    $region35: #{tpu_custom_call.1} parent=5 // pred_region
      // Predicated region
      $region37: #{tpu_custom_call.1} parent=35 // pred_check
        %p203 = pneg %p32
      $region38: #{tpu_custom_call.1} parent=35 // pred_check_branch
        %205 = sbr.rel (%p203) target = $region40
      $region39: #{tpu_custom_call.1} parent=35 // pred_region
        %p206 = scmp.lt.s32.totalorder %s12, 1
        %s207 = scalar_select %p206, %s12, 1
        %s208 = smul.addr %s207, 8
        %s209 = smul.addr %s208, 8
        %s210 = scalar_lea.vmem %s0, %s209
      $region40: #{tpu_custom_call.1} parent=35 // pred_fallthru
        _
    $region36: #{tpu_custom_call.1} parent=5 // pred_fallthru
      _
    %p211 = scmp.le.s32.totalorder 1, %s12
    %p212 = scmp.lt.s32.totalorder %s12, 3
    %p213 = pnand %p211, %p212
    %p214 = pneg %p213
    // Predicated region
    $region41: #{tpu_custom_call.1} parent=5 // pred_check
      _
    $region42: #{tpu_custom_call.1} parent=5 // pred_check_branch
      %216 = sbr.rel (%p213) target = $region44
    $region43: #{tpu_custom_call.1} parent=5 // pred_region
      %s217 = ssub.s32 %s12, 1
      %p218 = scmp.lt.s32.totalorder %s17, 1
      %s219 = scalar_select %p218, %s17, 1
      %s220 = smul.addr %s219, 8
      %s221 = smul.addr %s220, 8
      %s222 = scalar_lea.vmem %s0, %s221
      %p223 = pneg %p38
      %p224 = pneg %p35
      %p225 = pneg %p59
      %p226 = pneg %p56
      %p227 = pneg %p80
      %p228 = pneg %p77
      %p229 = pneg %p101
      %p230 = pneg %p98
      %p231 = pneg %p122
      %p232 = pneg %p119
      %p233 = pneg %p143
      %p234 = pneg %p140
      %p235 = pneg %p169
      %p236 = pneg %p166
      %p237 = scmp.lt.s32.totalorder %s17, 1
      %s238 = scalar_select %p237, %s17, 1
      %s239 = smul.addr %s238, 4
      %s240 = scalar_lea.vmem %s6, %s239
      %p241 = scmp.lt.s32.totalorder %s17, 1
      %s242 = scalar_select %p241, %s17, 1
      %s243 = smul.addr %s242, 8
      %s244 = smul.addr %s243, 8
      %s245 = scalar_lea.vmem %s0, %s244
      %p246 = scmp.lt.s32.totalorder %s17, 1
      %s247 = scalar_select %p246, %s17, 1
      %s248 = smul.addr %s247, 4
      %s249 = scalar_lea.vmem %s6, %s248
      %v250 = vld [vmem:[%s245] sm:$0xff]
      %v251 = vld [vmem:[%s245 + $0x8] sm:$0xff]
      %v252 = vld [vmem:[%s245 + $0x10] sm:$0xff]
      %v253 = vld [vmem:[%s245 + $0x18] sm:$0xff]
      %v254 = vld [vmem:[%s245 + $0x20] sm:$0xff]
      %v255 = vld [vmem:[%s245 + $0x28] sm:$0xff]
      %v256 = vld [vmem:[%s245 + $0x30] sm:$0xff]
      %v257 = vld [vmem:[%s245 + $0x38] sm:$0xff]
      %v258 = vld [vmem:[%s1] sm:$0xff]
      %v259 = vld [vmem:[%s1 + $0x8] sm:$0xff]
      %v260 = vld [vmem:[%s1 + $0x10] sm:$0xff]
      %v261 = vld [vmem:[%s1 + $0x18] sm:$0xff]
      %v262 = vld [vmem:[%s1 + $0x20] sm:$0xff]
      %v263 = vld [vmem:[%s1 + $0x28] sm:$0xff]
      %v264 = vld [vmem:[%s1 + $0x30] sm:$0xff]
      %v265 = vld [vmem:[%s1 + $0x38] sm:$0xff]
      %vm266 = vcmask 523264
      %v268 = vsel %vm266, %v258, 0
      %v271 = vsel %vm266, %v259, 0
      %v274 = vsel %vm266, %v260, 0
      %v277 = vsel %vm266, %v261, 0
      %v280 = vsel %vm266, %v262, 0
      %v283 = vsel %vm266, %v263, 0
      %v286 = vsel %vm266, %v264, 0
      %v289 = vsel %vm266, %v265, 0
      %291 = vmatprep.subr.mxu0 0.0
      %292 = vmatpush1.msra.mxu0 %v250
      %293 = vmatprep.subr.mxu0 0.0
      %294 = vmatpush1.msra.mxu0 %v251
      %295 = vmatprep.subr.mxu0 0.0
      %296 = vmatpush1.msra.mxu0 %v252
      %297 = vmatprep.subr.mxu0 0.0
      %298 = vmatpush1.msra.mxu0 %v253
      %299 = vmatprep.subr.mxu0 0.0
      %300 = vmatpush1.msra.mxu0 %v254
      %301 = vmatprep.subr.mxu0 0.0
      %302 = vmatpush1.msra.mxu0 %v255
      %303 = vmatprep.subr.mxu0 0.0
      %304 = vmatpush1.msra.mxu0 %v256
      %305 = vmatprep.subr.mxu0 0.0
      %306 = vmatpush1.msra.mxu0 %v257
      %307 = vmatprep.subr.mxu0 0.0
      %308 = vmatpush1.msra.mxu0 0.0
      %309 = vmatprep.subr.mxu0 0.0
      %310 = vmatpush1.msra.mxu0 0.0
      %311 = vmatprep.subr.mxu0 0.0
      %312 = vmatpush1.msra.mxu0 0.0
      %313 = vmatprep.subr.mxu0 0.0
      %314 = vmatpush1.msra.mxu0 0.0
      %315 = vmatprep.subr.mxu0 0.0
      %316 = vmatpush1.msra.mxu0 0.0
      %317 = vmatprep.subr.mxu0 0.0
      %318 = vmatpush1.msra.mxu0 0.0
      %319 = vmatprep.subr.mxu0 0.0
      %320 = vmatpush1.msra.mxu0 0.0
      %321 = vmatprep.subr.mxu0 0.0
      %322 = vmatpush1.msra.mxu0 0.0
      %323 = vmatprep.subr.mxu0 0.0
      %324 = vmatpush1.msra.mxu0 0.0
      %325 = vmatprep.subr.mxu0 0.0
      %326 = vmatpush1.msra.mxu0 0.0
      %327 = vmatprep.subr.mxu0 0.0
      %328 = vmatpush1.msra.mxu0 0.0
      %329 = vmatprep.subr.mxu0 0.0
      %330 = vmatpush1.msra.mxu0 0.0
      %331 = vmatprep.subr.mxu0 0.0
      %332 = vmatpush1.msra.mxu0 0.0
      %333 = vmatprep.subr.mxu0 0.0
      %334 = vmatpush1.msra.mxu0 0.0
      %335 = vmatprep.subr.mxu0 0.0
      %336 = vmatpush1.msra.mxu0 0.0
      %337 = vmatprep.subr.mxu0 0.0
      %338 = vmatpush1.msra.mxu0 0.0
      %339 = vmatprep.subr.mxu0 0.0
      %340 = vmatpush1.msra.mxu0 0.0
      %341 = vmatprep.subr.mxu0 0.0
      %342 = vmatpush1.msra.mxu0 0.0
      %343 = vmatprep.subr.mxu0 0.0
      %344 = vmatpush1.msra.mxu0 0.0
      %345 = vmatprep.subr.mxu0 0.0
      %346 = vmatpush1.msra.mxu0 0.0
      %347 = vmatprep.subr.mxu0 0.0
      %348 = vmatpush1.msra.mxu0 0.0
      %349 = vmatprep.subr.mxu0 0.0
      %350 = vmatpush1.msra.mxu0 0.0
      %351 = vmatprep.subr.mxu0 0.0
      %352 = vmatpush1.msra.mxu0 0.0
      %353 = vmatprep.subr.mxu0 0.0
      %354 = vmatpush1.msra.mxu0 0.0
      %355 = vmatprep.mubr.f32.mxu0 0.0
      %356 = vmatmul.mubr.f32.gmra.mrb[0].mxu0 %v268
      %v357 = vpop.f32.mrb[0].mxu0
      %v358 = vadd.f32 0.0, %v357
      %v359 = vpop.f32.mrb[0].mxu0
      %360 = vmatprep.mubr.f32.mxu0 0.0
      %361 = vmatmul.mubr.f32.gmra.mrb[0].mxu0 %v271
      %v362 = vpop.f32.mrb[0].mxu0
      %v363 = vadd.f32 0.0, %v362
      %v364 = vpop.f32.mrb[0].mxu0
      %365 = vmatprep.mubr.f32.mxu0 0.0
      %366 = vmatmul.mubr.f32.gmra.mrb[0].mxu0 %v274
      %v367 = vpop.f32.mrb[0].mxu0
      %v368 = vadd.f32 0.0, %v367
      %v369 = vpop.f32.mrb[0].mxu0
      %370 = vmatprep.mubr.f32.mxu0 0.0
      %371 = vmatmul.mubr.f32.gmra.mrb[0].mxu0 %v277
      %v372 = vpop.f32.mrb[0].mxu0
      %v373 = vadd.f32 0.0, %v372
      %v374 = vpop.f32.mrb[0].mxu0
      %375 = vmatprep.mubr.f32.mxu0 0.0
      %376 = vmatmul.mubr.f32.gmra.mrb[0].mxu0 %v280
      %v377 = vpop.f32.mrb[0].mxu0
      %v378 = vadd.f32 0.0, %v377
      %v379 = vpop.f32.mrb[0].mxu0
      %380 = vmatprep.mubr.f32.mxu0 0.0
      %381 = vmatmul.mubr.f32.gmra.mrb[0].mxu0 %v283
      %v382 = vpop.f32.mrb[0].mxu0
      %v383 = vadd.f32 0.0, %v382
      %v384 = vpop.f32.mrb[0].mxu0
      %385 = vmatprep.mubr.f32.mxu0 0.0
      %386 = vmatmul.mubr.f32.gmra.mrb[0].mxu0 %v286
      %v387 = vpop.f32.mrb[0].mxu0
      %v388 = vadd.f32 0.0, %v387
      %v389 = vpop.f32.mrb[0].mxu0
      %390 = vmatprep.mubr.f32.mxu0 0.0
      %391 = vmatmul.mubr.f32.gmra.mrb[0].mxu0 %v289
      %v392 = vpop.f32.mrb[0].mxu0
      %v393 = vadd.f32 0.0, %v392
      %v394 = vpop.f32.mrb[0].mxu0
      %395 = vdwg.mxu0
      %v396 = vld [vmem:[%s2] sm:$0xff]
      %v397 = vld [vmem:[%s2 + $0x8] sm:$0xff]
      %vm398 = vcmask 130048
      %v400 = vsel %vm398, %v358, 0
      %v403 = vsel %vm398, %v363, 0
      %v406 = vsel %vm398, %v368, 0
      %v409 = vsel %vm398, %v373, 0
      %v412 = vsel %vm398, %v378, 0
      %v415 = vsel %vm398, %v383, 0
      %v418 = vsel %vm398, %v388, 0
      %v421 = vsel %vm398, %v393, 0
      %423 = vmatprep.subr.mxu0 0.0
      %424 = vmatpush1.msra.mxu0 %v396
      %425 = vmatprep.subr.mxu0 0.0
      %426 = vmatpush1.msra.mxu0 %v397
      %427 = vmatprep.subr.mxu0 0.0
      %428 = vmatpush1.msra.mxu0 0.0
      %429 = vmatprep.subr.mxu0 0.0
      %430 = vmatpush1.msra.mxu0 0.0
      %431 = vmatprep.subr.mxu0 0.0
      %432 = vmatpush1.msra.mxu0 0.0
      %433 = vmatprep.subr.mxu0 0.0
      %434 = vmatpush1.msra.mxu0 0.0
      %435 = vmatprep.subr.mxu0 0.0
      %436 = vmatpush1.msra.mxu0 0.0
      %437 = vmatprep.subr.mxu0 0.0
      %438 = vmatpush1.msra.mxu0 0.0
      %439 = vmatprep.subr.mxu0 0.0
      %440 = vmatpush1.msra.mxu0 0.0
      %441 = vmatprep.subr.mxu0 0.0
      %442 = vmatpush1.msra.mxu0 0.0
      %443 = vmatprep.subr.mxu0 0.0
      %444 = vmatpush1.msra.mxu0 0.0
      %445 = vmatprep.subr.mxu0 0.0
      %446 = vmatpush1.msra.mxu0 0.0
      %447 = vmatprep.subr.mxu0 0.0
      %448 = vmatpush1.msra.mxu0 0.0
      %449 = vmatprep.subr.mxu0 0.0
      %450 = vmatpush1.msra.mxu0 0.0
      %451 = vmatprep.subr.mxu0 0.0
      %452 = vmatpush1.msra.mxu0 0.0
      %453 = vmatprep.subr.mxu0 0.0
      %454 = vmatpush1.msra.mxu0 0.0
      %455 = vmatprep.subr.mxu0 0.0
      %456 = vmatpush1.msra.mxu0 0.0
      %457 = vmatprep.subr.mxu0 0.0
      %458 = vmatpush1.msra.mxu0 0.0
      %459 = vmatprep.subr.mxu0 0.0
      %460 = vmatpush1.msra.mxu0 0.0
      %461 = vmatprep.subr.mxu0 0.0
      %462 = vmatpush1.msra.mxu0 0.0
      %463 = vmatprep.subr.mxu0 0.0
      %464 = vmatpush1.msra.mxu0 0.0
      %465 = vmatprep.subr.mxu0 0.0
      %466 = vmatpush1.msra.mxu0 0.0
      %467 = vmatprep.subr.mxu0 0.0
      %468 = vmatpush1.msra.mxu0 0.0
      %469 = vmatprep.subr.mxu0 0.0
      %470 = vmatpush1.msra.mxu0 0.0
      %471 = vmatprep.subr.mxu0 0.0
      %472 = vmatpush1.msra.mxu0 0.0
      %473 = vmatprep.subr.mxu0 0.0
      %474 = vmatpush1.msra.mxu0 0.0
      %475 = vmatprep.subr.mxu0 0.0
      %476 = vmatpush1.msra.mxu0 0.0
      %477 = vmatprep.subr.mxu0 0.0
      %478 = vmatpush1.msra.mxu0 0.0
      %479 = vmatprep.subr.mxu0 0.0
      %480 = vmatpush1.msra.mxu0 0.0
      %481 = vmatprep.subr.mxu0 0.0
      %482 = vmatpush1.msra.mxu0 0.0
      %483 = vmatprep.subr.mxu0 0.0
      %484 = vmatpush1.msra.mxu0 0.0
      %485 = vmatprep.subr.mxu0 0.0
      %486 = vmatpush1.msra.mxu0 0.0
      %487 = vmatprep.mubr.f32.mxu0 0.0
      %488 = vmatmul.mubr.f32.gmra.mrb[0].mxu0 %v400
      %v489 = vpop.f32.mrb[0].mxu0
      %v490 = vadd.f32 0.0, %v489
      %v491 = vpop.f32.mrb[0].mxu0
      %492 = vmatprep.mubr.f32.mxu0 0.0
      %493 = vmatmul.mubr.f32.gmra.mrb[0].mxu0 %v403
      %v494 = vpop.f32.mrb[0].mxu0
      %v495 = vadd.f32 0.0, %v494
      %v496 = vpop.f32.mrb[0].mxu0
      %497 = vmatprep.mubr.f32.mxu0 0.0
      %498 = vmatmul.mubr.f32.gmra.mrb[0].mxu0 %v406
      %v499 = vpop.f32.mrb[0].mxu0
      %v500 = vadd.f32 0.0, %v499
      %v501 = vpop.f32.mrb[0].mxu0
      %502 = vmatprep.mubr.f32.mxu0 0.0
      %503 = vmatmul.mubr.f32.gmra.mrb[0].mxu0 %v409
      %v504 = vpop.f32.mrb[0].mxu0
      %v505 = vadd.f32 0.0, %v504
      %v506 = vpop.f32.mrb[0].mxu0
      %507 = vmatprep.mubr.f32.mxu0 0.0
      %508 = vmatmul.mubr.f32.gmra.mrb[0].mxu0 %v412
      %v509 = vpop.f32.mrb[0].mxu0
      %v510 = vadd.f32 0.0, %v509
      %v511 = vpop.f32.mrb[0].mxu0
      %512 = vmatprep.mubr.f32.mxu0 0.0
      %513 = vmatmul.mubr.f32.gmra.mrb[0].mxu0 %v415
      %v514 = vpop.f32.mrb[0].mxu0
      %v515 = vadd.f32 0.0, %v514
      %v516 = vpop.f32.mrb[0].mxu0
      %517 = vmatprep.mubr.f32.mxu0 0.0
      %518 = vmatmul.mubr.f32.gmra.mrb[0].mxu0 %v418
      %v519 = vpop.f32.mrb[0].mxu0
      %v520 = vadd.f32 0.0, %v519
      %v521 = vpop.f32.mrb[0].mxu0
      %522 = vmatprep.mubr.f32.mxu0 0.0
      %523 = vmatmul.mubr.f32.gmra.mrb[0].mxu0 %v421
      %v524 = vpop.f32.mrb[0].mxu0
      %v525 = vadd.f32 0.0, %v524
      %v526 = vpop.f32.mrb[0].mxu0
      %527 = vdwg.mxu0
      %v528 = vmul.f32 %v490, 0.020408163
      %v529 = vmul.f32 %v495, 0.020408163
      %v530 = vmul.f32 %v500, 0.020408163
      %v531 = vmul.f32 %v505, 0.020408163
      %v532 = vmul.f32 %v510, 0.020408163
      %v533 = vmul.f32 %v515, 0.020408163
      %v534 = vmul.f32 %v520, 0.020408163
      %v535 = vmul.f32 %v525, 0.020408163
      %v536 = vsel %vm398, %v528, -inf
      %537 = vmax.xlane.f32.xlu0 %v536
      %v538 = vpop.xlane.xlu0 %537
      %v539 = vsel %vm398, %v529, -inf
      %540 = vmax.xlane.f32.xlu0 %v539
      %v541 = vpop.xlane.xlu0 %540
      %v542 = vsel %vm398, %v530, -inf
      %543 = vmax.xlane.f32.xlu0 %v542
      %v544 = vpop.xlane.xlu0 %543
      %v545 = vsel %vm398, %v531, -inf
      %546 = vmax.xlane.f32.xlu0 %v545
      %v547 = vpop.xlane.xlu0 %546
      %v548 = vsel %vm398, %v532, -inf
      %549 = vmax.xlane.f32.xlu0 %v548
      %v550 = vpop.xlane.xlu0 %549
      %v551 = vsel %vm398, %v533, -inf
      %552 = vmax.xlane.f32.xlu0 %v551
      %v553 = vpop.xlane.xlu0 %552
      %v554 = vsel %vm398, %v534, -inf
      %555 = vmax.xlane.f32.xlu0 %v554
      %v556 = vpop.xlane.xlu0 %555
      %v557 = vsel %vm398, %v535, -inf
      %558 = vmax.xlane.f32.xlu0 %v557
      %v559 = vpop.xlane.xlu0 %558
      %v560 = vmax.f32 %v538, %v541
      %v561 = vrot.slane %v560, 4
      %v562 = vmax.f32 %v560, %v561
      %v563 = vrot.slane %v562, 2
      %v564 = vmax.f32 %v562, %v563
      %v565 = vrot.slane %v564, 1
      %v566 = vmax.f32 %v564, %v565
      %v567 = vmax.f32 %v544, %v547
      %v568 = vrot.slane %v567, 4
      %v569 = vmax.f32 %v567, %v568
      %v570 = vrot.slane %v569, 2
      %v571 = vmax.f32 %v569, %v570
      %v572 = vrot.slane %v571, 1
      %v573 = vmax.f32 %v571, %v572
      %v574 = vmax.f32 %v550, %v553
      %v575 = vrot.slane %v574, 4
      %v576 = vmax.f32 %v574, %v575
      %v577 = vrot.slane %v576, 2
      %v578 = vmax.f32 %v576, %v577
      %v579 = vrot.slane %v578, 1
      %v580 = vmax.f32 %v578, %v579
      %v581 = vmax.f32 %v556, %v559
      %v582 = vrot.slane %v581, 4
      %v583 = vmax.f32 %v581, %v582
      %v584 = vrot.slane %v583, 2
      %v585 = vmax.f32 %v583, %v584
      %v586 = vrot.slane %v585, 1
      %v587 = vmax.f32 %v585, %v586
      %v588 = vld [vmem:[%s3] sm:$0x1]
      %v589 = vld [vmem:[%s3 + $0x1] sm:$0x1]
      %v590 = vld [vmem:[%s3 + $0x2] sm:$0x1]
      %v591 = vld [vmem:[%s3 + $0x3] sm:$0x1]
      %v592 = vsub.f32 %v528, %v566
      %v593 = vsub.f32 %v529, %v566
      %v594 = vsub.f32 %v530, %v573
      %v595 = vsub.f32 %v531, %v573
      %v596 = vsub.f32 %v532, %v580
      %v597 = vsub.f32 %v533, %v580
      %v598 = vsub.f32 %v534, %v587
      %v599 = vsub.f32 %v535, %v587
      %v604 = vlaneseq
      %v605 = vshrl.u32 %v604, 7
      %v606 = vsub.s32 0, %v605
      %v607 = vrot.slane %v588, %v606
      %v608 = vlaneseq
      %v609 = vshrl.u32 %v608, 7
      %v610 = vsub.s32 0, %v609
      %v611 = vrot.slane %v589, %v610
      %v612 = vlaneseq
      %v613 = vshrl.u32 %v612, 7
      %v614 = vsub.s32 0, %v613
      %v615 = vrot.slane %v590, %v614
      %v616 = vlaneseq
      %v617 = vshrl.u32 %v616, 7
      %v618 = vsub.s32 0, %v617
      %v619 = vrot.slane %v591, %v618
      %620 = vset.pattern.permute.xlu0 0
      %621 = vperm.xlu0 %620, %v607
      %v622 = vpop.permute.xlu0 %621
      %624 = vset.pattern.permute.xlu0 0
      %625 = vperm.xlu0 %624, %v611
      %v626 = vpop.permute.xlu0 %625
      %628 = vset.pattern.permute.xlu0 0
      %629 = vperm.xlu0 %628, %v615
      %v630 = vpop.permute.xlu0 %629
      %632 = vset.pattern.permute.xlu0 0
      %633 = vperm.xlu0 %632, %v619
      %v634 = vpop.permute.xlu0 %633
      %v636 = vmul.f32 %v622, %v592
      %v637 = vmul.f32 %v622, %v593
      %v638 = vmul.f32 %v626, %v594
      %v639 = vmul.f32 %v626, %v595
      %v640 = vmul.f32 %v630, %v596
      %v641 = vmul.f32 %v630, %v597
      %v642 = vmul.f32 %v634, %v598
      %v643 = vmul.f32 %v634, %v599
      %v644 = vmul.f32 %v636, 1.442695
      %v645 = vpow.pop %v644
      %v646 = vmul.f32 %v637, 1.442695
      %v647 = vpow.pop %v646
      %v648 = vmul.f32 %v638, 1.442695
      %v649 = vpow.pop %v648
      %v650 = vmul.f32 %v639, 1.442695
      %v651 = vpow.pop %v650
      %v652 = vmul.f32 %v640, 1.442695
      %v653 = vpow.pop %v652
      %v654 = vmul.f32 %v641, 1.442695
      %v655 = vpow.pop %v654
      %v656 = vmul.f32 %v642, 1.442695
      %v657 = vpow.pop %v656
      %v658 = vmul.f32 %v643, 1.442695
      %v659 = vpow.pop %v658
      %v660 = vsel %vm398, %v645, 0.0
      %v661 = vsel %vm398, %v647, 0.0
      %v662 = vadd.f32 %v660, %v661
      %v663 = vrot.slane %v662, 4
      %v664 = vadd.f32 %v662, %v663
      %v665 = vrot.slane %v664, 2
      %v666 = vadd.f32 %v664, %v665
      %v667 = vrot.slane %v666, 1
      %v668 = vadd.f32 %v666, %v667
      %v669 = vsel %vm398, %v649, 0.0
      %v670 = vsel %vm398, %v651, 0.0
      %v671 = vadd.f32 %v669, %v670
      %v672 = vrot.slane %v671, 4
      %v673 = vadd.f32 %v671, %v672
      %v674 = vrot.slane %v673, 2
      %v675 = vadd.f32 %v673, %v674
      %v676 = vrot.slane %v675, 1
      %v677 = vadd.f32 %v675, %v676
      %v678 = vsel %vm398, %v653, 0.0
      %v679 = vsel %vm398, %v655, 0.0
      %v680 = vadd.f32 %v678, %v679
      %v681 = vrot.slane %v680, 4
      %v682 = vadd.f32 %v680, %v681
      %v683 = vrot.slane %v682, 2
      %v684 = vadd.f32 %v682, %v683
      %v685 = vrot.slane %v684, 1
      %v686 = vadd.f32 %v684, %v685
      %v687 = vsel %vm398, %v657, 0.0
      %v688 = vsel %vm398, %v659, 0.0
      %v689 = vadd.f32 %v687, %v688
      %v690 = vrot.slane %v689, 4
      %v691 = vadd.f32 %v689, %v690
      %v692 = vrot.slane %v691, 2
      %v693 = vadd.f32 %v691, %v692
      %v694 = vrot.slane %v693, 1
      %v695 = vadd.f32 %v693, %v694
      %696 = vadd.xlane.f32.xlu0 %v660
      %v697 = vpop.xlane.xlu0 %696
      %698 = vadd.xlane.f32.xlu0 %v661
      %v699 = vpop.xlane.xlu0 %698
      %700 = vadd.xlane.f32.xlu0 %v669
      %v701 = vpop.xlane.xlu0 %700
      %702 = vadd.xlane.f32.xlu0 %v670
      %v703 = vpop.xlane.xlu0 %702
      %704 = vadd.xlane.f32.xlu0 %v678
      %v705 = vpop.xlane.xlu0 %704
      %706 = vadd.xlane.f32.xlu0 %v679
      %v707 = vpop.xlane.xlu0 %706
      %708 = vadd.xlane.f32.xlu0 %v687
      %v709 = vpop.xlane.xlu0 %708
      %710 = vadd.xlane.f32.xlu0 %v688
      %v711 = vpop.xlane.xlu0 %710
      %v712 = vsel %vm398, %v668, 0.0
      %713 = vadd.xlane.f32.xlu0 %v712
      %v714 = vpop.xlane.xlu0 %713
      %v715 = vsel %vm398, %v677, 0.0
      %716 = vadd.xlane.f32.xlu0 %v715
      %v717 = vpop.xlane.xlu0 %716
      %v718 = vsel %vm398, %v686, 0.0
      %719 = vadd.xlane.f32.xlu0 %v718
      %v720 = vpop.xlane.xlu0 %719
      %v721 = vsel %vm398, %v695, 0.0
      %722 = vadd.xlane.f32.xlu0 %v721
      %v723 = vpop.xlane.xlu0 %722
      %v724 = vld [vmem:[%s4] sm:$0x1]
      %v725 = vmul.f32 %v668, %v724
      %v726 = vmul.f32 %v677, %v724
      %v727 = vmul.f32 %v686, %v724
      %v728 = vmul.f32 %v695, %v724
      %vm729 = vcmask 122880
      %v730 = vsel %vm729, %v725, 0.0
      %731 = vadd.xlane.f32.xlu0 %v730
      %v732 = vpop.xlane.xlu0 %731
      %v733 = vsel %vm729, %v726, 0.0
      %734 = vadd.xlane.f32.xlu0 %v733
      %v735 = vpop.xlane.xlu0 %734
      %v736 = vsel %vm729, %v727, 0.0
      %737 = vadd.xlane.f32.xlu0 %v736
      %v738 = vpop.xlane.xlu0 %737
      %v739 = vsel %vm729, %v728, 0.0
      %740 = vadd.xlane.f32.xlu0 %v739
      %v741 = vpop.xlane.xlu0 %740
      %v742 = vld [vmem:[%s5] sm:$0xff]
      %v743 = vld [vmem:[%s5 + $0x8] sm:$0xff]
      %v744 = vmul.f32 %v697, %v742
      %v745 = vmul.f32 %v699, %v743
      %v746 = vmul.f32 %v701, %v742
      %v747 = vmul.f32 %v703, %v743
      %v748 = vmul.f32 %v705, %v742
      %v749 = vmul.f32 %v707, %v743
      %v750 = vmul.f32 %v709, %v742
      %v751 = vmul.f32 %v711, %v743
      %vm752 = vcmask 7168
      %v753 = vsel %vm752, %v744, 0.0
      %v754 = vsel %vm752, %v745, 0.0
      %v755 = vadd.f32 %v753, %v754
      %v756 = vrot.slane %v755, 4
      %v757 = vadd.f32 %v755, %v756
      %v758 = vrot.slane %v757, 2
      %v759 = vadd.f32 %v757, %v758
      %v760 = vrot.slane %v759, 1
      %v761 = vadd.f32 %v759, %v760
      %v762 = vsel %vm752, %v746, 0.0
      %v763 = vsel %vm752, %v747, 0.0
      %v764 = vadd.f32 %v762, %v763
      %v765 = vrot.slane %v764, 4
      %v766 = vadd.f32 %v764, %v765
      %v767 = vrot.slane %v766, 2
      %v768 = vadd.f32 %v766, %v767
      %v769 = vrot.slane %v768, 1
      %v770 = vadd.f32 %v768, %v769
      %v771 = vsel %vm752, %v748, 0.0
      %v772 = vsel %vm752, %v749, 0.0
      %v773 = vadd.f32 %v771, %v772
      %v774 = vrot.slane %v773, 4
      %v775 = vadd.f32 %v773, %v774
      %v776 = vrot.slane %v775, 2
      %v777 = vadd.f32 %v775, %v776
      %v778 = vrot.slane %v777, 1
      %v779 = vadd.f32 %v777, %v778
      %v780 = vsel %vm752, %v750, 0.0
      %v781 = vsel %vm752, %v751, 0.0
      %v782 = vadd.f32 %v780, %v781
      %v783 = vrot.slane %v782, 4
      %v784 = vadd.f32 %v782, %v783
      %v785 = vrot.slane %v784, 2
      %v786 = vadd.f32 %v784, %v785
      %v787 = vrot.slane %v786, 1
      %v788 = vadd.f32 %v786, %v787
      %v789 = vadd.f32 %v714, 1e-08
      %v790 = vadd.f32 %v717, 1e-08
      %v791 = vadd.f32 %v720, 1e-08
      %v792 = vadd.f32 %v723, 1e-08
      %v793 = vrcp.pop %v789
      %v794 = vmul.f32 1.0, %v793
      %v795 = vrcp.pop %v790
      %v796 = vmul.f32 1.0, %v795
      %v797 = vrcp.pop %v791
      %v798 = vmul.f32 1.0, %v797
      %v799 = vrcp.pop %v792
      %v800 = vmul.f32 1.0, %v799
      %v801 = vmul.f32 %v732, %v794
      %v802 = vmul.f32 %v735, %v796
      %v803 = vmul.f32 %v738, %v798
      %v804 = vmul.f32 %v741, %v800
      %v805 = vmul.f32 %v761, %v794
      %v806 = vmul.f32 %v770, %v796
      %v807 = vmul.f32 %v779, %v798
      %v808 = vmul.f32 %v788, %v800
      %813 = vrot.lane.b32.xlu0 %v805, 1
      %v814 = vpop.permute.xlu0 %813
      %815 = vrot.lane.b32.xlu0 %v806, 1
      %v816 = vpop.permute.xlu0 %815
      %817 = vrot.lane.b32.xlu0 %v807, 1
      %v818 = vpop.permute.xlu0 %817
      %819 = vrot.lane.b32.xlu0 %v808, 1
      %v820 = vpop.permute.xlu0 %819
      %v825 = vsel %vm752, %v801, %v814
      %v826 = vsel %vm752, %v802, %v816
      %v827 = vsel %vm752, %v803, %v818
      %v828 = vsel %vm752, %v804, %v820
      %vm829 = vcmask 8192
      %830 = vst.msk [vmem:[%s249] sm:$0x1] %vm829, %v825
      %831 = vst.msk [vmem:[%s249 + $0x1] sm:$0x1] %vm829, %v826
      %832 = vst.msk [vmem:[%s249 + $0x2] sm:$0x1] %vm829, %v827
      %833 = vst.msk [vmem:[%s249 + $0x3] sm:$0x1] %vm829, %v828
      %p834 = scmp.lt.s32.totalorder %s17, 1
      %s835 = scalar_select %p834, %s17, 1
      %s836 = smul.addr %s835, 4
      %s837 = scalar_lea.vmem %s6, %s836
      // Predicated region
      $region45: #{tpu_custom_call.1} parent=43 // pred_check
        %p838 = pneg %p166
      $region46: #{tpu_custom_call.1} parent=43 // pred_check_branch
        %840 = sbr.rel (%p838) target = $region48
      $region47: #{tpu_custom_call.1} parent=43 // pred_region
        _
      $region48: #{tpu_custom_call.1} parent=43 // pred_fallthru
        _
    $region44: #{tpu_custom_call.1} parent=5 // pred_fallthru
      _
    %p841 = scmp.le.s32.totalorder 2, %s12
    // Predicated region
    $region49: #{tpu_custom_call.1} parent=5 // pred_check
      %p842 = pneg %p841
    $region50: #{tpu_custom_call.1} parent=5 // pred_check_branch
      %844 = sbr.rel (%p842) target = $region52
    $region51: #{tpu_custom_call.1} parent=5 // pred_region
      %s845 = ssub.s32 %s12, 2
      // Predicated region
      $region53: #{tpu_custom_call.1} parent=51 // pred_check
        %p846 = pneg %p172
      $region54: #{tpu_custom_call.1} parent=51 // pred_check_branch
        %848 = sbr.rel (%p846) target = $region56
      $region55: #{tpu_custom_call.1} parent=51 // pred_region
        %p849 = scmp.lt.s32.totalorder %s18, 1
        %s850 = scalar_select %p849, %s18, 1
        %s851 = smul.addr %s850, 4
        %s852 = scalar_lea.vmem %s6, %s851
      $region56: #{tpu_custom_call.1} parent=51 // pred_fallthru
        _
    $region52: #{tpu_custom_call.1} parent=5 // pred_fallthru
      _
  $region6: #{tpu_custom_call.1} parent=0 // loop_footer
    %s16 = sadd.s32 1, %s12
  $region7: #{tpu_custom_call.1} parent=0 // loop_footer_branch
    %11 = sbr.rel target = $region3
  $region8: #{tpu_custom_call.1} parent=0 // loop_exit
    _

</llo_original>
